<compile_context>
chip_gen: v7x
topology: tpu7x:2x2x1
jax: 0.10.0
libtpu: 0.0.40
codegen_flags: <defaults>
</compile_context>

<pallas_src>
import functools

import jax
import jax.numpy as jnp
from jax.experimental import pallas as pl
from jax.experimental.pallas import tpu as pltpu


# --------------------------------------------------------------------------
# Kernel
# --------------------------------------------------------------------------
def _dilated_attn_kernel(x_ref, w_ref, b_ref, o_ref, *,
                         group, seg_dil, dim, flat_out, exp_bf16):
    G, S, D = group, seg_dil, dim

    x = x_ref[0]                                            # (G*S, D) bf16

    # Fused QKV projection: one MXU matmul, bf16 inputs, f32 accumulation.
    # The 1/sqrt(dim) scale is pre-folded into the q columns of w/b.
    qkv = jnp.dot(x, w_ref[...],
                  preferred_element_type=jnp.float32) + b_ref[...]   # (G*S, 3D)

    q = qkv[:, :D].astype(jnp.bfloat16).reshape(G, S, D)
    k = qkv[:, D:2 * D].astype(jnp.bfloat16).reshape(G, S, D)
    v = qkv[:, 2 * D:].astype(jnp.bfloat16).reshape(G, S, D)

    # Scores: contract last dims, batch over G (no explicit transpose).
    s = jax.lax.dot_general(
        q, k, dimension_numbers=(((2,), (2,)), ((0,), (0,))),
        preferred_element_type=jnp.float32)                 # (G, S, S) f32

    # Numerically stable softmax; exponent in bf16 where the EUP supports it.
    m = jnp.max(s, axis=-1, keepdims=True)
    if exp_bf16:
        p = jnp.exp((s - m).astype(jnp.bfloat16))           # (G, S, S) bf16
        denom = jnp.sum(p, axis=-1, keepdims=True, dtype=jnp.float32)
    else:
        p32 = jnp.exp(s - m)
        denom = jnp.sum(p32, axis=-1, keepdims=True)
        p = p32.astype(jnp.bfloat16)

    o = jax.lax.dot_general(
        p, v, dimension_numbers=(((2,), (1,)), ((0,), (0,))),
        preferred_element_type=jnp.float32)                 # (G, S, D) f32
    # Apply the denominator on the (S, D)-sized result via the EUP reciprocal.
    o = o * pl.reciprocal(denom, approx=True)

    if flat_out:
        o_ref[0] = o.reshape(G, S * D).astype(o_ref.dtype)  # lane-dense store
    else:
        o_ref[0] = o.reshape(G * S, D).astype(o_ref.dtype)  # already full-lane


# --------------------------------------------------------------------------
# Generation-aware sizing helpers
# --------------------------------------------------------------------------
def _device_kind():
    try:
        return jax.devices()[0].device_kind.lower()
    except Exception:
        return ""


def _supports_bf16_eup(kind):
    # v6e / v7x have a bf16 EUP; v5e and older do not.
    return not any(t in kind for t in ("v2", "v3", "v4", "v5"))


def _has_two_tensorcores(kind):
    # v7x has 2 TCs per chip; v4/v5p megacore also shard "parallel" grid axes.
    return any(t in kind for t in ("v7", "v4", "v5p"))


def _vmem_capacity_bytes():
    try:
        info = pltpu.get_tpu_info()
        cap = getattr(info, "vmem_capacity_bytes", None)
        if cap:
            return int(cap)
    except Exception:
        pass
    return 64 << 20        # conservative (v7x per-TC VMEM)


def _vmem_limit_bytes():
    cap = _vmem_capacity_bytes()
    # ~75% of physical, capped at 100 MiB: v5e/v6e (128 MiB) -> 96 MiB,
    # v7x (64 MiB) -> 48 MiB.
    return int(min(cap * 3 // 4, 100 << 20))


def _round_up(x, m):
    return (x + m - 1) // m * m


def _tile_bytes(rows, cols, itemsize):
    return _round_up(rows, 8) * _round_up(cols, 128) * itemsize


def _block_vmem_bytes(G, S, D, out_bytes):
    rows = G * S
    b = 0
    b += 2 * _tile_bytes(rows, D, 2)            # x tile bf16, double-buffered
    b += 2 * _tile_bytes(rows, D, out_bytes)    # out tile, double-buffered
    b += _tile_bytes(rows, 3 * D, 4)            # qkv f32
    b += 3 * G * _tile_bytes(S, D, 2)           # q/k/v bf16
    b += G * _tile_bytes(S, S, 4)               # scores f32
    b += G * _tile_bytes(S, S, 2)               # p bf16
    b += G * _tile_bytes(S, D, 4)               # o f32
    return b


def _choose_group(total, seg_dil, dim, out_bytes, vmem_limit, prefer_even_blocks):
    """Largest divisor G of `total` whose working set fits the VMEM budget.

    Single-TensorCore parts simply maximize G (MXU M-fill, fewer grid steps).
    Dual-TC parts prefer an even number of grid steps for core balance, as long
    as that costs at most a 2x reduction of G.
    """
    weight_bytes = _tile_bytes(dim, 3 * dim, 2) + _tile_bytes(1, 3 * dim, 4)
    budget = max(int(vmem_limit * 0.6) - weight_bytes, 1 << 20)

    divisors = [g for g in range(1, total + 1) if total % g == 0]
    fitting = [g for g in divisors
               if _block_vmem_bytes(g, seg_dil, dim, out_bytes) <= budget]
    if not fitting:
        fitting = [1]
    best = max(fitting)

    if prefer_even_blocks:
        even = [g for g in fitting if (total // g) % 2 == 0]
        if even:
            g_even = max(even)
            if 2 * g_even >= best:
                best = g_even
    return best


# --------------------------------------------------------------------------
# Host-side param fusion (hoisted out of the forward path)
# --------------------------------------------------------------------------
def fuse_qkv_params(params):
    """Fuse wq/wk/wv into one (dim, 3*dim) bf16 weight, fold the 1/sqrt(dim)
    attention scale into the q columns, and fuse the biases (f32)."""
    dim = params["wq"].shape[0]
    scale = dim ** -0.5
    w_qkv = jnp.concatenate(
        [params["wq"].T * scale, params["wk"].T, params["wv"].T], axis=1
    ).astype(jnp.bfloat16)                                  # (D, 3D)
    b_qkv = jnp.concatenate(
        [params["bq"] * scale, params["bk"], params["bv"]]
    ).reshape(1, 3 * dim).astype(jnp.float32)               # (1, 3D)
    return w_qkv, b_qkv


# --------------------------------------------------------------------------
# Forward
# --------------------------------------------------------------------------
def dilated_attention_forward(x, w_qkv, b_qkv, *, segment_size, dilation_rate,
                              group_size=None, out_dtype=None):
    """x: (batch, seq_len, dim) -> (batch, n_seg*seg_dil, dim)."""
    batch, seq_len, dim = x.shape
    assert w_qkv.shape == (dim, 3 * dim), (w_qkv.shape, dim)
    out_dtype = x.dtype if out_dtype is None else jnp.dtype(out_dtype)

    # --- glue: bf16 cast + pad + segment + dilate (half-size dilated copy) ---
    xh = x.astype(jnp.bfloat16)
    padding_len = (-seq_len) % segment_size
    if padding_len:
        xh = jnp.pad(xh, ((0, 0), (0, padding_len), (0, 0)))
    n_seg = (seq_len + padding_len) // segment_size
    xh = xh.reshape(batch, n_seg, segment_size, dim)[:, :, ::dilation_rate, :]
    seg_dil = xh.shape[2]
    # TODO(synk): fold the dilation stride into the kernel's DMA instead of
    # materializing the dilated copy in HBM.

    kind = _device_kind()
    vmem_limit = _vmem_limit_bytes()
    exp_bf16 = _supports_bf16_eup(kind)

    total = batch * n_seg
    if group_size is None:
        G = _choose_group(total, seg_dil, dim,
                          out_bytes=jnp.dtype(out_dtype).itemsize,
                          vmem_limit=vmem_limit,
                          prefer_even_blocks=_has_two_tensorcores(kind))
    else:
        G = group_size
    assert total % G == 0, (total, G)
    num_blocks = total // G

    xb = xh.reshape(num_blocks, G * seg_dil, dim)

    # Lane-dense flattened output only pays when dim < 128 (masked stores);
    # when dim % 128 == 0 the (G*S, D) store is already full-lane.
    flat_out = (dim % 128 != 0)

    in_specs = [
        pl.BlockSpec((1, G * seg_dil, dim), lambda i: (i, 0, 0)),   # packed x
        pl.BlockSpec((dim, 3 * dim), lambda i: (0, 0),
                     pipeline_mode=pl.Buffered(1)),                 # fused W
        pl.BlockSpec((1, 3 * dim), lambda i: (0, 0),
                     pipeline_mode=pl.Buffered(1)),                 # fused b
    ]
    if flat_out:
        out_shape = jax.ShapeDtypeStruct((num_blocks, G, seg_dil * dim),
                                         out_dtype)
        out_spec = pl.BlockSpec((1, G, seg_dil * dim), lambda i: (i, 0, 0))
    else:
        out_shape = jax.ShapeDtypeStruct((num_blocks, G * seg_dil, dim),
                                         out_dtype)
        out_spec = pl.BlockSpec((1, G * seg_dil, dim), lambda i: (i, 0, 0))

    kernel = functools.partial(
        _dilated_attn_kernel, group=G, seg_dil=seg_dil, dim=dim,
        flat_out=flat_out, exp_bf16=exp_bf16)

    out = pl.pallas_call(
        kernel,
        out_shape=out_shape,
        grid=(num_blocks,),
        in_specs=in_specs,
        out_specs=out_spec,
        compiler_params=pltpu.CompilerParams(
            dimension_semantics=("parallel",),
            vmem_limit_bytes=vmem_limit,
        ),
    )(xb, w_qkv, b_qkv)

    return out.reshape(batch, n_seg * seg_dil, dim)


# --------------------------------------------------------------------------
# Test / reference
# --------------------------------------------------------------------------
def init_params(key, dim):
    """Deterministic init mimicking nn.Linear(dim, dim) shapes."""
    ks = jax.random.split(key, 6)
    bound = 1.0 / (dim ** 0.5)
    u = lambda k, shape: jax.random.uniform(k, shape, jnp.float32, -bound, bound)
    return {
        "wq": u(ks[0], (dim, dim)), "bq": u(ks[1], (dim,)),
        "wk": u(ks[2], (dim, dim)), "bk": u(ks[3], (dim,)),
        "wv": u(ks[4], (dim, dim)), "bv": u(ks[5], (dim,)),
        # head_offsets / LayerNorm exist in the module but are unused in the
        # default forward path (qk_norm=False); not needed here.
    }


def _reference(x, params, *, segment_size, dilation_rate):
    """Pure-JAX f32 reference for a sanity check."""
    batch, seq_len, dim = x.shape
    pad = (-seq_len) % segment_size
    if pad:
        x = jnp.pad(x, ((0, 0), (0, pad), (0, 0)))
    x = x.reshape(batch, -1, segment_size, dim)[:, :, ::dilation_rate, :]
    q = x @ params["wq"].T + params["bq"]
    k = x @ params["wk"].T + params["bk"]
    v = x @ params["wv"].T + params["bv"]
    s = jnp.einsum("bnqd,bnkd->bnqk", q, k) * (dim ** -0.5)
    p = jax.nn.softmax(s, axis=-1)
    o = jnp.einsum("bnqk,bnkd->bnqd", p, v)
    return o.reshape(batch, -1, dim)


if __name__ == "__main__":
    dim = 32
    heads = 8            # heads only affects unused head_offsets in default path
    dilation_rate = 2
    segment_size = 8
    batch, seq_len = 2, 16

    key = jax.random.PRNGKey(0)
    kx, kp = jax.random.split(key)
    x = jax.random.normal(kx, (batch, seq_len, dim), dtype=jnp.float32)
    params = init_params(kp, dim)

    # Weight fusion hoisted out of the forward path (done once).
    w_qkv, b_qkv = fuse_qkv_params(params)

    fwd = jax.jit(functools.partial(
        dilated_attention_forward,
        segment_size=segment_size, dilation_rate=dilation_rate))
    out = jax.block_until_ready(fwd(x, w_qkv, b_qkv))

    ref = _reference(x, params, segment_size=segment_size,
                     dilation_rate=dilation_rate)
    assert out.shape == ref.shape, (out.shape, ref.shape)
    # bf16 MXU inputs + bf16 softmax exponent (f32 accumulation) -> looser
    # tolerance than the pure-f32 reference.
    assert jnp.allclose(out, ref, atol=3e-2, rtol=3e-2), "mismatch vs reference"

    print("KERNEL_OK")
</pallas_src>

<mosaic_0001>
module attributes {stable_mosaic.version = 11 : i64} {
  func.func @_dilated_attn_kernel(%arg0: i32, %arg1: memref<1x16x32xbf16, #tpu.memory_space<vmem>>, %arg2: memref<32x96xbf16, #tpu.memory_space<vmem>>, %arg3: memref<1x96xf32, #tpu.memory_space<vmem>>, %arg4: memref<1x4x128xf32, #tpu.memory_space<vmem>>) attributes {dimension_semantics = [#tpu.dimension_semantics<parallel>], iteration_bounds = array<i64: 1>, scalar_prefetch = 0 : i64, scratch_operands = 0 : i64, tpu.core_type = #tpu.core_type<tc>, window_params = [{transform_indices = @transform_0, window_bounds = array<i64: 1, 16, 32>}, {pipeline_mode = #tpu.pipeline_mode<synchronous>, transform_indices = @transform_1, window_bounds = array<i64: 32, 96>}, {pipeline_mode = #tpu.pipeline_mode<synchronous>, transform_indices = @transform_2, window_bounds = array<i64: 1, 96>}, {transform_indices = @transform_3, window_bounds = array<i64: 1, 4, 128>}]} {
    %c0 = arith.constant 0 : index
    %c0_0 = arith.constant 0 : index
    %c0_1 = arith.constant 0 : index
    %0 = vector.load %arg1[%c0, %c0_0, %c0_1] : memref<1x16x32xbf16, #tpu.memory_space<vmem>>, vector<1x16x32xbf16>
    %1 = vector.shape_cast %0 : vector<1x16x32xbf16> to vector<16x32xbf16>
    %c0_2 = arith.constant 0 : index
    %c0_3 = arith.constant 0 : index
    %2 = vector.load %arg2[%c0_2, %c0_3] : memref<32x96xbf16, #tpu.memory_space<vmem>>, vector<32x96xbf16>
    %cst = arith.constant dense<0.000000e+00> : vector<16x96xf32>
    %3 = tpu.matmul %1, %2, %cst {dimension_numbers = #tpu.dot_dimension_numbers<[1], [0], [0], [1], [0, 0, 1, 1], [], []>} : vector<16x32xbf16>, vector<32x96xbf16>, vector<16x96xf32> -> vector<16x96xf32>
    %c0_4 = arith.constant 0 : index
    %c0_5 = arith.constant 0 : index
    %4 = vector.load %arg3[%c0_4, %c0_5] : memref<1x96xf32, #tpu.memory_space<vmem>>, vector<1x96xf32>
    %5 = vector.broadcast %4 : vector<1x96xf32> to vector<16x96xf32>
    %6 = arith.addf %3, %5 : vector<16x96xf32>
    %7 = vector.extract_strided_slice %6 {offsets = [0, 0], sizes = [16, 32], strides = [1, 1]} : vector<16x96xf32> to vector<16x32xf32>
    %8 = arith.truncf %7 : vector<16x32xf32> to vector<16x32xbf16>
    %9 = vector.shape_cast %8 : vector<16x32xbf16> to vector<4x4x32xbf16>
    %10 = vector.extract_strided_slice %6 {offsets = [0, 32], sizes = [16, 32], strides = [1, 1]} : vector<16x96xf32> to vector<16x32xf32>
    %11 = arith.truncf %10 : vector<16x32xf32> to vector<16x32xbf16>
    %12 = vector.shape_cast %11 : vector<16x32xbf16> to vector<4x4x32xbf16>
    %13 = vector.extract_strided_slice %6 {offsets = [0, 64], sizes = [16, 32], strides = [1, 1]} : vector<16x96xf32> to vector<16x32xf32>
    %14 = arith.truncf %13 : vector<16x32xf32> to vector<16x32xbf16>
    %15 = vector.shape_cast %14 : vector<16x32xbf16> to vector<4x4x32xbf16>
    %cst_6 = arith.constant dense<0.000000e+00> : vector<4x4x4xf32>
    %16 = tpu.matmul %9, %12, %cst_6 {dimension_numbers = #tpu.dot_dimension_numbers<[2], [2], [1], [1], [0, 0, 0, 1, 1, 1], [0], [0]>} : vector<4x4x32xbf16>, vector<4x4x32xbf16>, vector<4x4x4xf32> -> vector<4x4x4xf32>
    %cst_7 = arith.constant dense<0xFF800000> : vector<4x4xf32>
    %17 = vector.multi_reduction <maximumf>, %16, %cst_7 [2] : vector<4x4x4xf32> to vector<4x4xf32>
    %18 = vector.shape_cast %17 : vector<4x4xf32> to vector<4x4x1xf32>
    %19 = vector.broadcast %18 : vector<4x4x1xf32> to vector<4x4x4xf32>
    %20 = arith.subf %16, %19 : vector<4x4x4xf32>
    %21 = arith.truncf %20 : vector<4x4x4xf32> to vector<4x4x4xbf16>
    %22 = math.exp %21 : vector<4x4x4xbf16>
    %23 = arith.extf %22 : vector<4x4x4xbf16> to vector<4x4x4xf32>
    %cst_8 = arith.constant dense<0.000000e+00> : vector<4x4xf32>
    %24 = vector.multi_reduction <add>, %23, %cst_8 [2] : vector<4x4x4xf32> to vector<4x4xf32>
    %25 = vector.shape_cast %24 : vector<4x4xf32> to vector<4x4x1xf32>
    %cst_9 = arith.constant dense<0.000000e+00> : vector<4x4x32xf32>
    %26 = tpu.matmul %22, %15, %cst_9 {dimension_numbers = #tpu.dot_dimension_numbers<[2], [1], [1], [2], [0, 0, 0, 1, 1, 2], [0], [0]>} : vector<4x4x4xbf16>, vector<4x4x32xbf16>, vector<4x4x32xf32> -> vector<4x4x32xf32>
    %27 = tpu.reciprocal %25 {approx = true} : vector<4x4x1xf32> -> vector<4x4x1xf32>
    %28 = vector.broadcast %27 : vector<4x4x1xf32> to vector<4x4x32xf32>
    %29 = arith.mulf %26, %28 : vector<4x4x32xf32>
    %30 = vector.shape_cast %29 : vector<4x4x32xf32> to vector<4x128xf32>
    %c0_10 = arith.constant 0 : index
    %c0_11 = arith.constant 0 : index
    %c0_12 = arith.constant 0 : index
    %31 = vector.load %arg4[%c0_10, %c0_11, %c0_12] : memref<1x4x128xf32, #tpu.memory_space<vmem>>, vector<1x4x128xf32>
    %32 = vector.shape_cast %31 : vector<1x4x128xf32> to vector<4x128xf32>
    %33 = vector.shape_cast %30 : vector<4x128xf32> to vector<1x4x128xf32>
    tpu.vector_store %arg4[%c0_10, %c0_11, %c0_12], %33 {strides = array<i32>} : memref<1x4x128xf32, #tpu.memory_space<vmem>>, vector<1x4x128xf32>,
    return
  }
  func.func @transform_0(%arg0: i32) -> (i32, i32, i32) {
    %c0_i32 = arith.constant 0 : i32
    %c0_i32_0 = arith.constant 0 : i32
    %c0_i32_1 = arith.constant 0 : i32
    return %arg0, %c0_i32, %c0_i32_0 : i32, i32, i32
  }
  func.func @transform_1(%arg0: i32) -> (i32, i32) {
    %c0_i32 = arith.constant 0 : i32
    %c0_i32_0 = arith.constant 0 : i32
    %c0_i32_1 = arith.constant 0 : i32
    return %c0_i32, %c0_i32_0 : i32, i32
  }
  func.func @transform_2(%arg0: i32) -> (i32, i32) {
    %c0_i32 = arith.constant 0 : i32
    %c0_i32_0 = arith.constant 0 : i32
    %c0_i32_1 = arith.constant 0 : i32
    return %c0_i32, %c0_i32_0 : i32, i32
  }
  func.func @transform_3(%arg0: i32) -> (i32, i32, i32) {
    %c0_i32 = arith.constant 0 : i32
    %c0_i32_0 = arith.constant 0 : i32
    %c0_i32_1 = arith.constant 0 : i32
    return %arg0, %c0_i32, %c0_i32_0 : i32, i32, i32
  }
}

</mosaic_0001>

<llo_original>
// kernel: dilated_attention_forward.1
$region0: #{dilated_attention_forward.1}
  #allocation0 [shape = 'u32[]', space=smem, size = 0x4, offset = 0x4, fixed_abs, tag = 'smem constant byte address 0x4 - core index']
  #allocation1 [shape = 'u32[144,128]{1,0:T(1,128)}', space=vmem, size = 0x12000, scoped, tag = 'internal scratch']
  %s0 = inlined_call_operand.vmem [shape: bf16[1,16,32], index: 0, kind: input, shape index: {}]
  %s1 = inlined_call_operand.vmem [shape: bf16[32,96], index: 1, kind: input, shape index: {}]
  %s2 = inlined_call_operand.vmem [shape: f32[1,96], index: 2, kind: input, shape index: {}]
  %s3 = inlined_call_operand.vmem [shape: f32[1,4,128], index: 3, kind: output, shape index: {}]
  %s4 = sld [smem:[#allocation0]]
  $region22: #{dilated_attention_forward.1} parent=0
    _
  %s6 = ssub.s32 1, %s4
  %s7 = scalar_select 0, %s6, %s4
  // Predicated region
  $region2: #{dilated_attention_forward.1} parent=0 // pred_check
    _
  $region3: #{dilated_attention_forward.1} parent=0 // pred_check_branch
    %9 = sbr.rel (0) target = $region5
  $region4: #{dilated_attention_forward.1} parent=0 // pred_region
    _
  $region5: #{dilated_attention_forward.1} parent=0 // pred_fallthru
    _
  // Predicated region
  $region6: #{dilated_attention_forward.1} parent=0 // pred_check
    _
  $region7: #{dilated_attention_forward.1} parent=0 // pred_check_branch
    %11 = sbr.rel (0) target = $region9
  $region8: #{dilated_attention_forward.1} parent=0 // pred_region
    _
  $region9: #{dilated_attention_forward.1} parent=0 // pred_fallthru
    _
  // Predicated region
  $region10: #{dilated_attention_forward.1} parent=0 // pred_check
    _
  $region11: #{dilated_attention_forward.1} parent=0 // pred_check_branch
    %13 = sbr.rel (0) target = $region13
  $region12: #{dilated_attention_forward.1} parent=0 // pred_region
    _
  $region13: #{dilated_attention_forward.1} parent=0 // pred_fallthru
    _
  %v15 = vld [vmem:[%s0] sm:$0xf]
  %v16 = vld [vmem:[%s0 + $0x4] sm:$0xf]
  %v17 = vld [vmem:[%s1] sm:$0xf]
  %v18 = vld [vmem:[%s1 + $0x4] sm:$0xf]
  %v19 = vld [vmem:[%s1 + $0x8] sm:$0xf]
  %v20 = vld [vmem:[%s1 + $0xc] sm:$0xf]
  %v21 = vld [vmem:[%s2] sm:$0x1]
  %v23 = vlaneseq
  %v24 = vshrl.u32 %v23, 7
  %v25 = vsub.s32 0, %v24
  %v26 = vrot.slane %v21, %v25
  %v30 = vunpack.c.l.b16 %v15
  %v31 = vunpack.c.l.b16 %v16
  %v32 = vpack.c.b16 %v31, %v30
  %v37 = vunpack.c.l.b16 %v17
  %v38 = vunpack.c.l.b16 %v18
  %v39 = vunpack.c.l.b16 %v19
  %v40 = vunpack.c.l.b16 %v20
  %v41 = vpack.c.b16 %v38, %v37
  %v42 = vpack.c.b16 %v40, %v39
  %vm45 = vcmask 261120
  %v47 = vsel %vm45, %v32, 0
  %49 = vmatprep.subr.bf16.mxu0 0
  %50 = vmatpush1.bf16.msra.mxu0 %v41
  %51 = vmatprep.subr.bf16.mxu0 0
  %52 = vmatpush1.bf16.msra.mxu0 %v42
  %53 = vmatprep.subr.bf16.mxu0 0
  %54 = vmatpush1.bf16.msra.mxu0 0
  %55 = vmatprep.subr.bf16.mxu0 0
  %56 = vmatpush1.bf16.msra.mxu0 0
  %57 = vmatprep.subr.bf16.mxu0 0
  %58 = vmatpush1.bf16.msra.mxu0 0
  %59 = vmatprep.subr.bf16.mxu0 0
  %60 = vmatpush1.bf16.msra.mxu0 0
  %61 = vmatprep.subr.bf16.mxu0 0
  %62 = vmatpush1.bf16.msra.mxu0 0
  %63 = vmatprep.subr.bf16.mxu0 0
  %64 = vmatpush1.bf16.msra.mxu0 0
  %65 = vmatprep.subr.bf16.mxu0 0
  %66 = vmatpush1.bf16.msra.mxu0 0
  %67 = vmatprep.subr.bf16.mxu0 0
  %68 = vmatpush1.bf16.msra.mxu0 0
  %69 = vmatprep.subr.bf16.mxu0 0
  %70 = vmatpush1.bf16.msra.mxu0 0
  %71 = vmatprep.subr.bf16.mxu0 0
  %72 = vmatpush1.bf16.msra.mxu0 0
  %73 = vmatprep.subr.bf16.mxu0 0
  %74 = vmatpush1.bf16.msra.mxu0 0
  %75 = vmatprep.subr.bf16.mxu0 0
  %76 = vmatpush1.bf16.msra.mxu0 0
  %77 = vmatprep.subr.bf16.mxu0 0
  %78 = vmatpush1.bf16.msra.mxu0 0
  %79 = vmatprep.subr.bf16.mxu0 0
  %80 = vmatpush1.bf16.msra.mxu0 0
  %81 = vmatprep.mubr.bf16.mxu0 0
  %82 = vmatmul.mubr.bf16.gmra.mrb[0].mxu0 %v47
  %v83 = vpop.f32.mrb[0].mxu0
  %v84 = vadd.f32 %v26, %v83
  %v85 = vpop.f32.mrb[0].mxu0
  %v86 = vpop.f32.mrb[0].mxu0
  %v87 = vadd.f32 %v26, %v86
  %v88 = vpop.f32.mrb[0].mxu0
  %89 = vdwg.mxu0
  %v90 = vpack.c.bf16 %v87, %v84
  %v92 = vcombine.high %v90, %v90
  %v94 = vunpack.c.l.s4 1983009808
  %v95 = vunpack.c.0.s8 %v94
  %v96 = vlaneseq
  %v97 = vshrl.u32 %v96, 7
  %v98 = vsub.s32 %v95, %v97
  %v99 = vrot.slane %v90, %v98
  %v101 = vunpack.c.l.s4 1983009808
  %v102 = vunpack.c.0.s8 %v101
  %v103 = vlaneseq
  %v104 = vshrl.u32 %v103, 7
  %v105 = vsub.s32 %v102, %v104
  %v106 = vrot.slane %v92, %v105
  %v107 = vcombine.high %v99, %v99
  %v108 = vcombine.high %v106, %v106
  %v110 = vunpack.c.l.s4 1983009808
  %v111 = vunpack.c.0.s8 %v110
  %v112 = vlaneseq
  %v113 = vshrl.u32 %v112, 7
  %v114 = vsub.s32 %v111, %v113
  %v115 = vrot.slane %v99, %v114
  %116 = vrot.lane.b32.xlu0 %v115, 96
  %v117 = vpop.permute.xlu0 %116
  %v119 = vsel %vm45, %v99, 0
  %v122 = vsel %vm45, %v117, 0
  %124 = vmatprep.subr.bf16.mxu0 0
  %125 = vmatpush1.bf16.xpose.msra.mxu0 %v122
  %126 = vmatprep.subr.bf16.mxu0 0
  %127 = vmatpush1.bf16.xpose.msra.mxu0 0
  %128 = vmatprep.subr.bf16.mxu0 0
  %129 = vmatpush1.bf16.xpose.msra.mxu0 0
  %130 = vmatprep.subr.bf16.mxu0 0
  %131 = vmatpush1.bf16.xpose.msra.mxu0 0
  %132 = vmatprep.subr.bf16.mxu0 0
  %133 = vmatpush1.bf16.xpose.msra.mxu0 0
  %134 = vmatprep.subr.bf16.mxu0 0
  %135 = vmatpush1.bf16.xpose.msra.mxu0 0
  %136 = vmatprep.subr.bf16.mxu0 0
  %137 = vmatpush1.bf16.xpose.msra.mxu0 0
  %138 = vmatprep.subr.bf16.mxu0 0
  %139 = vmatpush1.bf16.xpose.msra.mxu0 0
  %140 = vmatprep.subr.bf16.mxu0 0
  %141 = vmatpush1.bf16.xpose.msra.mxu0 0
  %142 = vmatprep.subr.bf16.mxu0 0
  %143 = vmatpush1.bf16.xpose.msra.mxu0 0
  %144 = vmatprep.subr.bf16.mxu0 0
  %145 = vmatpush1.bf16.xpose.msra.mxu0 0
  %146 = vmatprep.subr.bf16.mxu0 0
  %147 = vmatpush1.bf16.xpose.msra.mxu0 0
  %148 = vmatprep.subr.bf16.mxu0 0
  %149 = vmatpush1.bf16.xpose.msra.mxu0 0
  %150 = vmatprep.subr.bf16.mxu0 0
  %151 = vmatpush1.bf16.xpose.msra.mxu0 0
  %152 = vmatprep.subr.bf16.mxu0 0
  %153 = vmatpush1.bf16.xpose.msra.mxu0 0
  %154 = vmatprep.subr.bf16.mxu0 0
  %155 = vmatpush1.bf16.xpose.msra.mxu0 0
  %156 = vmatprep.mubr.bf16.mxu0 0
  %157 = vmatmul.mubr.bf16.gmra.mrb[0].mxu0 %v119
  %v158 = vpop.f32.mrb[0].mxu0
  %v159 = vadd.f32 0.0, %v158
  %v160 = vpop.f32.mrb[0].mxu0
  %v161 = vpop.f32.mrb[0].mxu0
  %v162 = vpop.f32.mrb[0].mxu0
  %163 = vdwg.mxu0
  %v165 = vunpack.c.l.s4 1983009808
  %v166 = vunpack.c.0.s8 %v165
  %v167 = vlaneseq
  %v168 = vshrl.u32 %v167, 7
  %v169 = vsub.s32 %v166, %v168
  %v170 = vrot.slane %v107, %v169
  %171 = vrot.lane.b32.xlu0 %v170, 96
  %v172 = vpop.permute.xlu0 %171
  %v174 = vsel %vm45, %v107, 0
  %v177 = vsel %vm45, %v172, 0
  %179 = vmatprep.subr.bf16.mxu0 0
  %180 = vmatpush1.bf16.xpose.msra.mxu0 %v177
  %181 = vmatprep.subr.bf16.mxu0 0
  %182 = vmatpush1.bf16.xpose.msra.mxu0 0
  %183 = vmatprep.subr.bf16.mxu0 0
  %184 = vmatpush1.bf16.xpose.msra.mxu0 0
  %185 = vmatprep.subr.bf16.mxu0 0
  %186 = vmatpush1.bf16.xpose.msra.mxu0 0
  %187 = vmatprep.subr.bf16.mxu0 0
  %188 = vmatpush1.bf16.xpose.msra.mxu0 0
  %189 = vmatprep.subr.bf16.mxu0 0
  %190 = vmatpush1.bf16.xpose.msra.mxu0 0
  %191 = vmatprep.subr.bf16.mxu0 0
  %192 = vmatpush1.bf16.xpose.msra.mxu0 0
  %193 = vmatprep.subr.bf16.mxu0 0
  %194 = vmatpush1.bf16.xpose.msra.mxu0 0
  %195 = vmatprep.subr.bf16.mxu0 0
  %196 = vmatpush1.bf16.xpose.msra.mxu0 0
  %197 = vmatprep.subr.bf16.mxu0 0
  %198 = vmatpush1.bf16.xpose.msra.mxu0 0
  %199 = vmatprep.subr.bf16.mxu0 0
  %200 = vmatpush1.bf16.xpose.msra.mxu0 0
  %201 = vmatprep.subr.bf16.mxu0 0
  %202 = vmatpush1.bf16.xpose.msra.mxu0 0
  %203 = vmatprep.subr.bf16.mxu0 0
  %204 = vmatpush1.bf16.xpose.msra.mxu0 0
  %205 = vmatprep.subr.bf16.mxu0 0
  %206 = vmatpush1.bf16.xpose.msra.mxu0 0
  %207 = vmatprep.subr.bf16.mxu0 0
  %208 = vmatpush1.bf16.xpose.msra.mxu0 0
  %209 = vmatprep.subr.bf16.mxu0 0
  %210 = vmatpush1.bf16.xpose.msra.mxu0 0
  %211 = vmatprep.mubr.bf16.mxu0 0
  %212 = vmatmul.mubr.bf16.gmra.mrb[0].mxu0 %v174
  %v213 = vpop.f32.mrb[0].mxu0
  %v214 = vadd.f32 0.0, %v213
  %v215 = vpop.f32.mrb[0].mxu0
  %v216 = vpop.f32.mrb[0].mxu0
  %v217 = vpop.f32.mrb[0].mxu0
  %218 = vdwg.mxu0
  %v220 = vunpack.c.l.s4 1983009808
  %v221 = vunpack.c.0.s8 %v220
  %v222 = vlaneseq
  %v223 = vshrl.u32 %v222, 7
  %v224 = vsub.s32 %v221, %v223
  %v225 = vrot.slane %v106, %v224
  %226 = vrot.lane.b32.xlu0 %v225, 96
  %v227 = vpop.permute.xlu0 %226
  %v229 = vsel %vm45, %v106, 0
  %v232 = vsel %vm45, %v227, 0
  %234 = vmatprep.subr.bf16.mxu0 0
  %235 = vmatpush1.bf16.xpose.msra.mxu0 %v232
  %236 = vmatprep.subr.bf16.mxu0 0
  %237 = vmatpush1.bf16.xpose.msra.mxu0 0
  %238 = vmatprep.subr.bf16.mxu0 0
  %239 = vmatpush1.bf16.xpose.msra.mxu0 0
  %240 = vmatprep.subr.bf16.mxu0 0
  %241 = vmatpush1.bf16.xpose.msra.mxu0 0
  %242 = vmatprep.subr.bf16.mxu0 0
  %243 = vmatpush1.bf16.xpose.msra.mxu0 0
  %244 = vmatprep.subr.bf16.mxu0 0
  %245 = vmatpush1.bf16.xpose.msra.mxu0 0
  %246 = vmatprep.subr.bf16.mxu0 0
  %247 = vmatpush1.bf16.xpose.msra.mxu0 0
  %248 = vmatprep.subr.bf16.mxu0 0
  %249 = vmatpush1.bf16.xpose.msra.mxu0 0
  %250 = vmatprep.subr.bf16.mxu0 0
  %251 = vmatpush1.bf16.xpose.msra.mxu0 0
  %252 = vmatprep.subr.bf16.mxu0 0
  %253 = vmatpush1.bf16.xpose.msra.mxu0 0
  %254 = vmatprep.subr.bf16.mxu0 0
  %255 = vmatpush1.bf16.xpose.msra.mxu0 0
  %256 = vmatprep.subr.bf16.mxu0 0
  %257 = vmatpush1.bf16.xpose.msra.mxu0 0
  %258 = vmatprep.subr.bf16.mxu0 0
  %259 = vmatpush1.bf16.xpose.msra.mxu0 0
  %260 = vmatprep.subr.bf16.mxu0 0
  %261 = vmatpush1.bf16.xpose.msra.mxu0 0
  %262 = vmatprep.subr.bf16.mxu0 0
  %263 = vmatpush1.bf16.xpose.msra.mxu0 0
  %264 = vmatprep.subr.bf16.mxu0 0
  %265 = vmatpush1.bf16.xpose.msra.mxu0 0
  %266 = vmatprep.mubr.bf16.mxu0 0
  %267 = vmatmul.mubr.bf16.gmra.mrb[0].mxu0 %v229
  %v268 = vpop.f32.mrb[0].mxu0
  %v269 = vadd.f32 0.0, %v268
  %v270 = vpop.f32.mrb[0].mxu0
  %v271 = vpop.f32.mrb[0].mxu0
  %v272 = vpop.f32.mrb[0].mxu0
  %273 = vdwg.mxu0
  %v275 = vunpack.c.l.s4 1983009808
  %v276 = vunpack.c.0.s8 %v275
  %v277 = vlaneseq
  %v278 = vshrl.u32 %v277, 7
  %v279 = vsub.s32 %v276, %v278
  %v280 = vrot.slane %v108, %v279
  %281 = vrot.lane.b32.xlu0 %v280, 96
  %v282 = vpop.permute.xlu0 %281
  %v284 = vsel %vm45, %v108, 0
  %v287 = vsel %vm45, %v282, 0
  %289 = vmatprep.subr.bf16.mxu0 0
  %290 = vmatpush1.bf16.xpose.msra.mxu0 %v287
  %291 = vmatprep.subr.bf16.mxu0 0
  %292 = vmatpush1.bf16.xpose.msra.mxu0 0
  %293 = vmatprep.subr.bf16.mxu0 0
  %294 = vmatpush1.bf16.xpose.msra.mxu0 0
  %295 = vmatprep.subr.bf16.mxu0 0
  %296 = vmatpush1.bf16.xpose.msra.mxu0 0
  %297 = vmatprep.subr.bf16.mxu0 0
  %298 = vmatpush1.bf16.xpose.msra.mxu0 0
  %299 = vmatprep.subr.bf16.mxu0 0
  %300 = vmatpush1.bf16.xpose.msra.mxu0 0
  %301 = vmatprep.subr.bf16.mxu0 0
  %302 = vmatpush1.bf16.xpose.msra.mxu0 0
  %303 = vmatprep.subr.bf16.mxu0 0
  %304 = vmatpush1.bf16.xpose.msra.mxu0 0
  %305 = vmatprep.subr.bf16.mxu0 0
  %306 = vmatpush1.bf16.xpose.msra.mxu0 0
  %307 = vmatprep.subr.bf16.mxu0 0
  %308 = vmatpush1.bf16.xpose.msra.mxu0 0
  %309 = vmatprep.subr.bf16.mxu0 0
  %310 = vmatpush1.bf16.xpose.msra.mxu0 0
  %311 = vmatprep.subr.bf16.mxu0 0
  %312 = vmatpush1.bf16.xpose.msra.mxu0 0
  %313 = vmatprep.subr.bf16.mxu0 0
  %314 = vmatpush1.bf16.xpose.msra.mxu0 0
  %315 = vmatprep.subr.bf16.mxu0 0
  %316 = vmatpush1.bf16.xpose.msra.mxu0 0
  %317 = vmatprep.subr.bf16.mxu0 0
  %318 = vmatpush1.bf16.xpose.msra.mxu0 0
  %319 = vmatprep.subr.bf16.mxu0 0
  %320 = vmatpush1.bf16.xpose.msra.mxu0 0
  %321 = vmatprep.mubr.bf16.mxu0 0
  %322 = vmatmul.mubr.bf16.gmra.mrb[0].mxu0 %v284
  %v323 = vpop.f32.mrb[0].mxu0
  %v324 = vadd.f32 0.0, %v323
  %v325 = vpop.f32.mrb[0].mxu0
  %v326 = vpop.f32.mrb[0].mxu0
  %v327 = vpop.f32.mrb[0].mxu0
  %328 = vdwg.mxu0
  %vm329 = vcmask 27648
  %v330 = vsel %vm329, %v159, -inf
  %331 = vmax.xlane.f32.xlu0 %v330
  %v332 = vpop.xlane.xlu0 %331
  %v333 = vsel %vm329, %v214, -inf
  %334 = vmax.xlane.f32.xlu0 %v333
  %v335 = vpop.xlane.xlu0 %334
  %v336 = vsel %vm329, %v269, -inf
  %337 = vmax.xlane.f32.xlu0 %v336
  %v338 = vpop.xlane.xlu0 %337
  %v339 = vsel %vm329, %v324, -inf
  %340 = vmax.xlane.f32.xlu0 %v339
  %v341 = vpop.xlane.xlu0 %340
  %v342 = vsub.f32 %v159, %v332
  %v343 = vsub.f32 %v214, %v335
  %v344 = vsub.f32 %v269, %v338
  %v345 = vsub.f32 %v324, %v341
  %v346 = vpack.c.bf16 %v342, %v342
  %v347 = vpack.c.bf16 %v343, %v343
  %v348 = vpack.c.bf16 %v344, %v344
  %v349 = vpack.c.bf16 %v345, %v345
  %v351 = vmul.bf16 %v346, 1069105081
  %v352 = vpow.bf16.pop %v351
  %v354 = vmul.bf16 %v347, 1069105081
  %v355 = vpow.bf16.pop %v354
  %v357 = vmul.bf16 %v348, 1069105081
  %v358 = vpow.bf16.pop %v357
  %v360 = vmul.bf16 %v349, 1069105081
  %v361 = vpow.bf16.pop %v360
  %v362 = vunpack.c.l.bf16 %v352
  %v363 = vunpack.c.l.bf16 %v355
  %v364 = vunpack.c.l.bf16 %v358
  %v365 = vunpack.c.l.bf16 %v361
  %v366 = vsel %vm329, %v362, 0.0
  %367 = vadd.xlane.f32.xlu0 %v366
  %v368 = vpop.xlane.xlu0 %367
  %v369 = vsel %vm329, %v363, 0.0
  %370 = vadd.xlane.f32.xlu0 %v369
  %v371 = vpop.xlane.xlu0 %370
  %v372 = vsel %vm329, %v364, 0.0
  %373 = vadd.xlane.f32.xlu0 %v372
  %v374 = vpop.xlane.xlu0 %373
  %v375 = vsel %vm329, %v365, 0.0
  %376 = vadd.xlane.f32.xlu0 %v375
  %v377 = vpop.xlane.xlu0 %376
  %378 = vrot.lane.b32.xlu0 %v115, 64
  %v379 = vpop.permute.xlu0 %378
  %vm380 = vcmask 31744
  %v382 = vsel %vm380, %v352, 0
  %vm384 = vcmask 1041408
  %v386 = vsel %vm384, %v379, 0
  %388 = vmatprep.subr.bf16.mxu0 0
  %389 = vmatpush1.bf16.msra.mxu0 %v386
  %390 = vmatprep.subr.bf16.mxu0 0
  %391 = vmatpush1.bf16.msra.mxu0 0
  %392 = vmatprep.subr.bf16.mxu0 0
  %393 = vmatpush1.bf16.msra.mxu0 0
  %394 = vmatprep.subr.bf16.mxu0 0
  %395 = vmatpush1.bf16.msra.mxu0 0
  %396 = vmatprep.subr.bf16.mxu0 0
  %397 = vmatpush1.bf16.msra.mxu0 0
  %398 = vmatprep.subr.bf16.mxu0 0
  %399 = vmatpush1.bf16.msra.mxu0 0
  %400 = vmatprep.subr.bf16.mxu0 0
  %401 = vmatpush1.bf16.msra.mxu0 0
  %402 = vmatprep.subr.bf16.mxu0 0
  %403 = vmatpush1.bf16.msra.mxu0 0
  %404 = vmatprep.subr.bf16.mxu0 0
  %405 = vmatpush1.bf16.msra.mxu0 0
  %406 = vmatprep.subr.bf16.mxu0 0
  %407 = vmatpush1.bf16.msra.mxu0 0
  %408 = vmatprep.subr.bf16.mxu0 0
  %409 = vmatpush1.bf16.msra.mxu0 0
  %410 = vmatprep.subr.bf16.mxu0 0
  %411 = vmatpush1.bf16.msra.mxu0 0
  %412 = vmatprep.subr.bf16.mxu0 0
  %413 = vmatpush1.bf16.msra.mxu0 0
  %414 = vmatprep.subr.bf16.mxu0 0
  %415 = vmatpush1.bf16.msra.mxu0 0
  %416 = vmatprep.subr.bf16.mxu0 0
  %417 = vmatpush1.bf16.msra.mxu0 0
  %418 = vmatprep.subr.bf16.mxu0 0
  %419 = vmatpush1.bf16.msra.mxu0 0
  %420 = vmatprep.mubr.bf16.mxu0 0
  %421 = vmatmul.mubr.bf16.gmra.mrb[0].mxu0 %v382
  %v422 = vpop.f32.mrb[0].mxu0
  %v423 = vadd.f32 0.0, %v422
  %v424 = vpop.f32.mrb[0].mxu0
  %v425 = vpop.f32.mrb[0].mxu0
  %v426 = vpop.f32.mrb[0].mxu0
  %427 = vdwg.mxu0
  %428 = vrot.lane.b32.xlu0 %v170, 64
  %v429 = vpop.permute.xlu0 %428
  %v431 = vsel %vm380, %v355, 0
  %v434 = vsel %vm384, %v429, 0
  %436 = vmatprep.subr.bf16.mxu0 0
  %437 = vmatpush1.bf16.msra.mxu0 %v434
  %438 = vmatprep.subr.bf16.mxu0 0
  %439 = vmatpush1.bf16.msra.mxu0 0
  %440 = vmatprep.subr.bf16.mxu0 0
  %441 = vmatpush1.bf16.msra.mxu0 0
  %442 = vmatprep.subr.bf16.mxu0 0
  %443 = vmatpush1.bf16.msra.mxu0 0
  %444 = vmatprep.subr.bf16.mxu0 0
  %445 = vmatpush1.bf16.msra.mxu0 0
  %446 = vmatprep.subr.bf16.mxu0 0
  %447 = vmatpush1.bf16.msra.mxu0 0
  %448 = vmatprep.subr.bf16.mxu0 0
  %449 = vmatpush1.bf16.msra.mxu0 0
  %450 = vmatprep.subr.bf16.mxu0 0
  %451 = vmatpush1.bf16.msra.mxu0 0
  %452 = vmatprep.subr.bf16.mxu0 0
  %453 = vmatpush1.bf16.msra.mxu0 0
  %454 = vmatprep.subr.bf16.mxu0 0
  %455 = vmatpush1.bf16.msra.mxu0 0
  %456 = vmatprep.subr.bf16.mxu0 0
  %457 = vmatpush1.bf16.msra.mxu0 0
  %458 = vmatprep.subr.bf16.mxu0 0
  %459 = vmatpush1.bf16.msra.mxu0 0
  %460 = vmatprep.subr.bf16.mxu0 0
  %461 = vmatpush1.bf16.msra.mxu0 0
  %462 = vmatprep.subr.bf16.mxu0 0
  %463 = vmatpush1.bf16.msra.mxu0 0
  %464 = vmatprep.subr.bf16.mxu0 0
  %465 = vmatpush1.bf16.msra.mxu0 0
  %466 = vmatprep.subr.bf16.mxu0 0
  %467 = vmatpush1.bf16.msra.mxu0 0
  %468 = vmatprep.mubr.bf16.mxu0 0
  %469 = vmatmul.mubr.bf16.gmra.mrb[0].mxu0 %v431
  %v470 = vpop.f32.mrb[0].mxu0
  %v471 = vadd.f32 0.0, %v470
  %v472 = vpop.f32.mrb[0].mxu0
  %v473 = vpop.f32.mrb[0].mxu0
  %v474 = vpop.f32.mrb[0].mxu0
  %475 = vdwg.mxu0
  %476 = vrot.lane.b32.xlu0 %v225, 64
  %v477 = vpop.permute.xlu0 %476
  %v479 = vsel %vm380, %v358, 0
  %v482 = vsel %vm384, %v477, 0
  %484 = vmatprep.subr.bf16.mxu0 0
  %485 = vmatpush1.bf16.msra.mxu0 %v482
  %486 = vmatprep.subr.bf16.mxu0 0
  %487 = vmatpush1.bf16.msra.mxu0 0
  %488 = vmatprep.subr.bf16.mxu0 0
  %489 = vmatpush1.bf16.msra.mxu0 0
  %490 = vmatprep.subr.bf16.mxu0 0
  %491 = vmatpush1.bf16.msra.mxu0 0
  %492 = vmatprep.subr.bf16.mxu0 0
  %493 = vmatpush1.bf16.msra.mxu0 0
  %494 = vmatprep.subr.bf16.mxu0 0
  %495 = vmatpush1.bf16.msra.mxu0 0
  %496 = vmatprep.subr.bf16.mxu0 0
  %497 = vmatpush1.bf16.msra.mxu0 0
  %498 = vmatprep.subr.bf16.mxu0 0
  %499 = vmatpush1.bf16.msra.mxu0 0
  %500 = vmatprep.subr.bf16.mxu0 0
  %501 = vmatpush1.bf16.msra.mxu0 0
  %502 = vmatprep.subr.bf16.mxu0 0
  %503 = vmatpush1.bf16.msra.mxu0 0
  %504 = vmatprep.subr.bf16.mxu0 0
  %505 = vmatpush1.bf16.msra.mxu0 0
  %506 = vmatprep.subr.bf16.mxu0 0
  %507 = vmatpush1.bf16.msra.mxu0 0
  %508 = vmatprep.subr.bf16.mxu0 0
  %509 = vmatpush1.bf16.msra.mxu0 0
  %510 = vmatprep.subr.bf16.mxu0 0
  %511 = vmatpush1.bf16.msra.mxu0 0
  %512 = vmatprep.subr.bf16.mxu0 0
  %513 = vmatpush1.bf16.msra.mxu0 0
  %514 = vmatprep.subr.bf16.mxu0 0
  %515 = vmatpush1.bf16.msra.mxu0 0
  %516 = vmatprep.mubr.bf16.mxu0 0
  %517 = vmatmul.mubr.bf16.gmra.mrb[0].mxu0 %v479
  %v518 = vpop.f32.mrb[0].mxu0
  %v519 = vadd.f32 0.0, %v518
  %v520 = vpop.f32.mrb[0].mxu0
  %v521 = vpop.f32.mrb[0].mxu0
  %v522 = vpop.f32.mrb[0].mxu0
  %523 = vdwg.mxu0
  %524 = vrot.lane.b32.xlu0 %v280, 64
  %v525 = vpop.permute.xlu0 %524
  %v527 = vsel %vm380, %v361, 0
  %v530 = vsel %vm384, %v525, 0
  %532 = vmatprep.subr.bf16.mxu0 0
  %533 = vmatpush1.bf16.msra.mxu0 %v530
  %534 = vmatprep.subr.bf16.mxu0 0
  %535 = vmatpush1.bf16.msra.mxu0 0
  %536 = vmatprep.subr.bf16.mxu0 0
  %537 = vmatpush1.bf16.msra.mxu0 0
  %538 = vmatprep.subr.bf16.mxu0 0
  %539 = vmatpush1.bf16.msra.mxu0 0
  %540 = vmatprep.subr.bf16.mxu0 0
  %541 = vmatpush1.bf16.msra.mxu0 0
  %542 = vmatprep.subr.bf16.mxu0 0
  %543 = vmatpush1.bf16.msra.mxu0 0
  %544 = vmatprep.subr.bf16.mxu0 0
  %545 = vmatpush1.bf16.msra.mxu0 0
  %546 = vmatprep.subr.bf16.mxu0 0
  %547 = vmatpush1.bf16.msra.mxu0 0
  %548 = vmatprep.subr.bf16.mxu0 0
  %549 = vmatpush1.bf16.msra.mxu0 0
  %550 = vmatprep.subr.bf16.mxu0 0
  %551 = vmatpush1.bf16.msra.mxu0 0
  %552 = vmatprep.subr.bf16.mxu0 0
  %553 = vmatpush1.bf16.msra.mxu0 0
  %554 = vmatprep.subr.bf16.mxu0 0
  %555 = vmatpush1.bf16.msra.mxu0 0
  %556 = vmatprep.subr.bf16.mxu0 0
  %557 = vmatpush1.bf16.msra.mxu0 0
  %558 = vmatprep.subr.bf16.mxu0 0
  %559 = vmatpush1.bf16.msra.mxu0 0
  %560 = vmatprep.subr.bf16.mxu0 0
  %561 = vmatpush1.bf16.msra.mxu0 0
  %562 = vmatprep.subr.bf16.mxu0 0
  %563 = vmatpush1.bf16.msra.mxu0 0
  %564 = vmatprep.mubr.bf16.mxu0 0
  %565 = vmatmul.mubr.bf16.gmra.mrb[0].mxu0 %v527
  %v566 = vpop.f32.mrb[0].mxu0
  %v567 = vadd.f32 0.0, %v566
  %v568 = vpop.f32.mrb[0].mxu0
  %v569 = vpop.f32.mrb[0].mxu0
  %v570 = vpop.f32.mrb[0].mxu0
  %571 = vdwg.mxu0
  %v572 = vrcp.pop %v368
  %v573 = vrcp.pop %v371
  %v574 = vrcp.pop %v374
  %v575 = vrcp.pop %v377
  %v576 = vmul.f32 %v423, %v572
  %v577 = vmul.f32 %v471, %v573
  %v578 = vmul.f32 %v519, %v574
  %v579 = vmul.f32 %v567, %v575
  %v580 = vcombine.low %v576, %v578
  %v582 = vunpack.c.l.s4 1983009808
  %v583 = vunpack.c.0.s8 %v582
  %v584 = vlaneseq
  %v585 = vshrl.u32 %v584, 7
  %v586 = vsub.s32 %v583, %v585
  %v587 = vrot.slane %v580, %v586
  %v588 = vcombine.low %v577, %v579
  %v590 = vunpack.c.l.s4 1983009808
  %v591 = vunpack.c.0.s8 %v590
  %v592 = vlaneseq
  %v593 = vshrl.u32 %v592, 7
  %v594 = vsub.s32 %v591, %v593
  %v595 = vrot.slane %v588, %v594
  %v596 = vcombine.low %v587, %v595
  %v597 = vcombine.high %v587, %v595
  %v599 = vunpack.c.l.s4 1934713408
  %v600 = vunpack.c.0.s8 %v599
  %v601 = vlaneseq
  %v602 = vshrl.u32 %v601, 7
  %v603 = vsub.s32 %v600, %v602
  %v604 = vrot.slane %v596, %v603
  %v606 = vunpack.c.l.s4 1934713408
  %v607 = vunpack.c.0.s8 %v606
  %v608 = vlaneseq
  %v609 = vshrl.u32 %v608, 7
  %v610 = vsub.s32 %v607, %v609
  %v611 = vrot.slane %v597, %v610
  %v612 = vcombine.high %v604, 0.0
  %v613 = vcombine.high %v611, 0.0
  %615 = vrot.lane.b32.xlu0 %v612, 32
  %v616 = vpop.permute.xlu0 %615
  %619 = vrot.lane.b32.xlu0 %v611, 64
  %v620 = vpop.permute.xlu0 %619
  %623 = vrot.lane.b32.xlu0 %v613, 96
  %v624 = vpop.permute.xlu0 %623
  %v626 = vsel %vm45, %v604, %v616
  %vm627 = vcmask 523264
  %v628 = vsel %vm627, %v626, %v620
  %vm629 = vcmask 785408
  %v630 = vsel %vm629, %v628, %v624
  %631 = vst [vmem:[%s3] sm:$0xf] %v630
  // Predicated region
  $region14: #{dilated_attention_forward.1} parent=0 // pred_check
    _
  $region15: #{dilated_attention_forward.1} parent=0 // pred_check_branch
    %633 = sbr.rel (0) target = $region17
  $region16: #{dilated_attention_forward.1} parent=0 // pred_region
    _
  $region17: #{dilated_attention_forward.1} parent=0 // pred_fallthru
    _
  // Predicated region
  $region18: #{dilated_attention_forward.1} parent=0 // pred_check
    _
  $region19: #{dilated_attention_forward.1} parent=0 // pred_check_branch
    %635 = sbr.rel (0) target = $region21
  $region20: #{dilated_attention_forward.1} parent=0 // pred_region
    _
  $region21: #{dilated_attention_forward.1} parent=0 // pred_fallthru
    _

</llo_original>
